<compile_context>
chip_gen: v7x
topology: tpu7x:2x2x1
jax: 0.10.0
libtpu: 0.0.40
codegen_flags: <defaults>
</compile_context>

<pallas_src>
import functools

import jax
import jax.numpy as jnp
from jax import lax
from jax.experimental import pallas as pl
from jax.experimental.pallas import tpu as pltpu

# ---- feature-extractor hyperparameters (deterministic, defined in-script) ----
C_IN = 4
C_OUT = 8
KH = KW = 3
FEAT_DIM = 32
MAX_BLK_B = 32  # pooling selector is (blk_b*P, blk_b): keep quadratic growth bounded


def _im2col_T(x):
    """x: (N, C, H, W) -> transposed im2col patches (C*KH*KW, N*H*W).

    Row order (c, kh, kw) matches torch `conv_w.reshape(C_OUT, -1)`; column
    order is (n, h, w) so a contiguous column block == a contiguous block of
    images (lane-dense per grid step).
    """
    N, C, H, W = x.shape
    xp = jnp.pad(x, ((0, 0), (0, 0), (1, 1), (1, 1)))
    cols = []
    for dh in range(KH):
        for dw in range(KW):
            cols.append(xp[:, :, dh:dh + H, dw:dw + W])       # (N, C, H, W)
    pat = jnp.stack(cols, axis=2)                             # (N, C, 9, H, W)
    pat = pat.transpose(1, 2, 0, 3, 4)                        # (C, 9, N, H, W)
    return pat.reshape(C * KH * KW, N * H * W)


def _feat_kernel(p_ref, sel_ref, cw_ref, cb_ref, fw_ref, fb_ref, o_ref, *, inv_p):
    # p_ref:   (K, BLK_B*P)       bf16  transposed im2col patches (lane-dense)
    # sel_ref: (BLK_B*P, BLK_B)   bf16  0/1 per-image pooling indicator
    # cw_ref:  (C_OUT, K)         bf16  conv weight (im2col layout)
    # cb_ref:  (C_OUT, 1)         f32   conv bias
    # fw_ref:  (C_OUT, F)         f32   fc weight
    # fb_ref:  (1, F)             f32   fc bias
    # o_ref:   (1, BLK_B, F)      f32   features for this block of images
    #
    # Conv as W @ patches -> (C_OUT=8, BLK_B*P): the f32 intermediate is only
    # 8 sublanes x lane-dense, so bias/ReLU/cast touch a few vregs (no spills).
    conv_t = jnp.dot(cw_ref[...], p_ref[...],
                     preferred_element_type=jnp.float32)          # (C_OUT, BLK_B*P)
    conv_t = jnp.maximum(conv_t + cb_ref[...], 0.0)               # bias + ReLU (f32 VPU)
    # Per-image sum pool via the MXU (0/1 selector); 1/P applied in f32 below.
    pooled_t = jnp.dot(conv_t.astype(jnp.bfloat16), sel_ref[...],
                       preferred_element_type=jnp.float32)        # (C_OUT, BLK_B)
    # fc: contract the channel axis of the tiny pooled tile directly
    # (lhs-transposed matmul; avoids an explicit relayout), f32 throughout.
    feats = lax.dot_general(pooled_t * inv_p, fw_ref[...],
                            dimension_numbers=(((0,), (0,)), ((), ())),
                            preferred_element_type=jnp.float32)   # (BLK_B, F)
    o_ref[0] = (feats + fb_ref[...]).astype(o_ref.dtype)


def _prefer_single_block():
    """Single-TC chips (v5e/v6e) prefer one grid step for tiny batches; chips
    with 2 TensorCores (v4/v7x) prefer an even number of 'parallel' blocks."""
    try:
        kind = jax.devices()[0].device_kind.lower()
    except Exception:
        return False
    return ("v5" in kind) or ("v6" in kind)


def _pick_blk_b(nb):
    """Images per grid step."""
    if nb <= 4 or _prefer_single_block():
        blk = nb                      # one grid step (no per-step overhead)
    else:
        blk = -(-nb // 2)             # exactly two blocks -> both v7x TCs
    blk = -(-blk // 4) * 4            # multiple of 4: aligned sublanes for the
                                      # (blk_b, F) output tile
    return max(4, min(blk, MAX_BLK_B))


def feature_extractor(x, params):
    """Fused Pallas feature extractor. x: (N, C_IN, H, W) f32 -> (N, FEAT_DIM)."""
    conv_w, conv_b, fc_w, fc_b = params
    NB, C, H, W = x.shape
    P = H * W
    K = C * KH * KW
    F = FEAT_DIM

    blk_b = _pick_blk_b(NB)
    num_blocks = -(-NB // blk_b)
    nb_pad = num_blocks * blk_b

    if nb_pad != NB:
        x = jnp.pad(x, ((0, nb_pad - NB), (0, 0), (0, 0), (0, 0)))

    # im2col in JAX (tiny at these sizes); bf16 halves the patch DMA bytes.
    patches_t = _im2col_T(x).astype(jnp.bfloat16)                 # (K, nb_pad*P)

    # 0/1 per-image pooling indicator (sum); 1/P is applied in f32 in-kernel
    # so the average is exact regardless of whether P is a power of two.
    sel_t = jnp.repeat(jnp.eye(blk_b, dtype=jnp.bfloat16), P, axis=0)  # (blk_b*P, blk_b)

    # Weight preprocessing: a handful of tiny reshapes/casts, folded by jit.
    cw2d = conv_w.reshape(C_OUT, K).astype(jnp.bfloat16)          # (C_OUT, K)
    cb2d = conv_b.reshape(C_OUT, 1).astype(jnp.float32)
    fw2d = fc_w.astype(jnp.float32)                               # (C_OUT, F)
    fb2d = fc_b.reshape(1, F).astype(jnp.float32)

    kernel = functools.partial(_feat_kernel, inv_p=1.0 / float(P))

    out = pl.pallas_call(
        kernel,
        out_shape=jax.ShapeDtypeStruct((num_blocks, blk_b, F), jnp.float32),
        grid=(num_blocks,),
        in_specs=[
            pl.BlockSpec((K, blk_b * P), lambda i: (0, i)),        # patches slab
            pl.BlockSpec((blk_b * P, blk_b), lambda i: (0, 0)),    # pool selector
            pl.BlockSpec((C_OUT, K), lambda i: (0, 0)),            # conv weight
            pl.BlockSpec((C_OUT, 1), lambda i: (0, 0)),            # conv bias
            pl.BlockSpec((C_OUT, F), lambda i: (0, 0)),            # fc weight
            pl.BlockSpec((1, F), lambda i: (0, 0)),                # fc bias
        ],
        out_specs=pl.BlockSpec((1, blk_b, F), lambda i: (i, 0, 0)),
        compiler_params=pltpu.CompilerParams(
            dimension_semantics=("parallel",)),
    )(patches_t, sel_t, cw2d, cb2d, fw2d, fb2d)

    return out.reshape(nb_pad, F)[:NB]


def siamese_forward(image1, image2, image3, params):
    """SiameseNeuralNetwork.forward: shared-weight triple apply, one kernel."""
    B = image1.shape[0]
    x_all = jnp.concatenate([image1, image2, image3], axis=0)     # (3B, C, H, W)
    feats = feature_extractor(x_all, params)                      # (3B, FEAT_DIM)
    return feats[:B], feats[B:2 * B], feats[2 * B:3 * B]


# ---- pure-JAX f32 reference (semantic check vs. the PyTorch extractor) ------
def _ref_extractor(x, params):
    conv_w, conv_b, fc_w, fc_b = params
    y = lax.conv_general_dilated(
        x, conv_w, window_strides=(1, 1), padding="SAME",
        dimension_numbers=("NCHW", "OIHW", "NCHW"))
    y = y + conv_b.reshape(1, -1, 1, 1)
    y = jnp.maximum(y, 0.0)
    pooled = y.mean(axis=(2, 3))
    return pooled @ fc_w + fc_b.reshape(1, -1)


def _init_params(key):
    k1, k2, k3, k4 = jax.random.split(key, 4)
    conv_w = 0.1 * jax.random.normal(k1, (C_OUT, C_IN, KH, KW), jnp.float32)
    conv_b = 0.1 * jax.random.normal(k2, (C_OUT,), jnp.float32)
    fc_w = 0.1 * jax.random.normal(k3, (C_OUT, FEAT_DIM), jnp.float32)
    fc_b = 0.1 * jax.random.normal(k4, (FEAT_DIM,), jnp.float32)
    return conv_w, conv_b, fc_w, fc_b


if __name__ == "__main__":
    key = jax.random.PRNGKey(0)
    kp, k1, k2, k3 = jax.random.split(key, 4)
    params = _init_params(kp)

    B, H, W = 2, 16, 16
    image1 = jax.random.normal(k1, (B, C_IN, H, W), jnp.float32)
    image2 = jax.random.normal(k2, (B, C_IN, H, W), jnp.float32)
    image3 = jax.random.normal(k3, (B, C_IN, H, W), jnp.float32)

    fwd = jax.jit(siamese_forward)
    f1, f2, f3 = fwd(image1, image2, image3, params)
    jax.block_until_ready((f1, f2, f3))

    # Kernel uses bf16 MXU inputs for the conv/pool matmuls -> compare against
    # the f32 reference with a bf16-appropriate tolerance (intentional).
    for img, feat in ((image1, f1), (image2, f2), (image3, f3)):
        ref = _ref_extractor(img, params)
        assert feat.shape == (B, FEAT_DIM)
        assert jnp.allclose(feat, ref, atol=1e-2, rtol=1e-2), \
            float(jnp.max(jnp.abs(feat - ref)))

    print("KERNEL_OK")
</pallas_src>

<mosaic_0001>
module attributes {stable_mosaic.version = 11 : i64} {
  func.func @_feat_kernel(%arg0: i32, %arg1: memref<36x1024xbf16, #tpu.memory_space<vmem>>, %arg2: memref<1024x4xbf16, #tpu.memory_space<vmem>>, %arg3: memref<8x36xbf16, #tpu.memory_space<vmem>>, %arg4: memref<8x1xf32, #tpu.memory_space<vmem>>, %arg5: memref<8x32xf32, #tpu.memory_space<vmem>>, %arg6: memref<1x32xf32, #tpu.memory_space<vmem>>, %arg7: memref<1x4x32xf32, #tpu.memory_space<vmem>>) attributes {dimension_semantics = [#tpu.dimension_semantics<parallel>], iteration_bounds = array<i64: 2>, scalar_prefetch = 0 : i64, scratch_operands = 0 : i64, tpu.core_type = #tpu.core_type<tc>, window_params = [{transform_indices = @transform_0, window_bounds = array<i64: 36, 1024>}, {pipeline_mode = #tpu.pipeline_mode<synchronous>, transform_indices = @transform_1, window_bounds = array<i64: 1024, 4>}, {pipeline_mode = #tpu.pipeline_mode<synchronous>, transform_indices = @transform_2, window_bounds = array<i64: 8, 36>}, {pipeline_mode = #tpu.pipeline_mode<synchronous>, transform_indices = @transform_3, window_bounds = array<i64: 8, 1>}, {pipeline_mode = #tpu.pipeline_mode<synchronous>, transform_indices = @transform_4, window_bounds = array<i64: 8, 32>}, {pipeline_mode = #tpu.pipeline_mode<synchronous>, transform_indices = @transform_5, window_bounds = array<i64: 1, 32>}, {transform_indices = @transform_6, window_bounds = array<i64: 1, 4, 32>}]} {
    %c0 = arith.constant 0 : index
    %c0_0 = arith.constant 0 : index
    %0 = vector.load %arg3[%c0, %c0_0] : memref<8x36xbf16, #tpu.memory_space<vmem>>, vector<8x36xbf16>
    %c0_1 = arith.constant 0 : index
    %c0_2 = arith.constant 0 : index
    %1 = vector.load %arg1[%c0_1, %c0_2] : memref<36x1024xbf16, #tpu.memory_space<vmem>>, vector<36x1024xbf16>
    %cst = arith.constant dense<0.000000e+00> : vector<8x1024xf32>
    %2 = tpu.matmul %0, %1, %cst {dimension_numbers = #tpu.dot_dimension_numbers<[1], [0], [0], [1], [0, 0, 1, 1], [], []>} : vector<8x36xbf16>, vector<36x1024xbf16>, vector<8x1024xf32> -> vector<8x1024xf32>
    %c0_3 = arith.constant 0 : index
    %c0_4 = arith.constant 0 : index
    %3 = vector.load %arg4[%c0_3, %c0_4] : memref<8x1xf32, #tpu.memory_space<vmem>>, vector<8x1xf32>
    %4 = vector.broadcast %3 : vector<8x1xf32> to vector<8x1024xf32>
    %5 = arith.addf %2, %4 : vector<8x1024xf32>
    %cst_5 = arith.constant 0.000000e+00 : f32
    %6 = vector.broadcast %cst_5 : f32 to vector<8x1024xf32>
    %7 = arith.maximumf %5, %6 : vector<8x1024xf32>
    %8 = arith.truncf %7 : vector<8x1024xf32> to vector<8x1024xbf16>
    %c0_6 = arith.constant 0 : index
    %c0_7 = arith.constant 0 : index
    %9 = vector.load %arg2[%c0_6, %c0_7] : memref<1024x4xbf16, #tpu.memory_space<vmem>>, vector<1024x4xbf16>
    %cst_8 = arith.constant dense<0.000000e+00> : vector<8x4xf32>
    %10 = tpu.matmul %8, %9, %cst_8 {dimension_numbers = #tpu.dot_dimension_numbers<[1], [0], [0], [1], [0, 0, 1, 1], [], []>} : vector<8x1024xbf16>, vector<1024x4xbf16>, vector<8x4xf32> -> vector<8x4xf32>
    %cst_9 = arith.constant 3.906250e-03 : f32
    %11 = vector.broadcast %cst_9 : f32 to vector<8x4xf32>
    %12 = arith.mulf %10, %11 : vector<8x4xf32>
    %c0_10 = arith.constant 0 : index
    %c0_11 = arith.constant 0 : index
    %13 = vector.load %arg5[%c0_10, %c0_11] : memref<8x32xf32, #tpu.memory_space<vmem>>, vector<8x32xf32>
    %cst_12 = arith.constant dense<0.000000e+00> : vector<4x32xf32>
    %14 = tpu.matmul %12, %13, %cst_12 {dimension_numbers = #tpu.dot_dimension_numbers<[0], [0], [1], [1], [0, 1, 1, 1], [], []>} : vector<8x4xf32>, vector<8x32xf32>, vector<4x32xf32> -> vector<4x32xf32>
    %c0_13 = arith.constant 0 : index
    %c0_14 = arith.constant 0 : index
    %15 = vector.load %arg6[%c0_13, %c0_14] : memref<1x32xf32, #tpu.memory_space<vmem>>, vector<1x32xf32>
    %16 = vector.broadcast %15 : vector<1x32xf32> to vector<4x32xf32>
    %17 = arith.addf %14, %16 : vector<4x32xf32>
    %c0_15 = arith.constant 0 : index
    %c0_16 = arith.constant 0 : index
    %c0_17 = arith.constant 0 : index
    %18 = vector.load %arg7[%c0_15, %c0_16, %c0_17] : memref<1x4x32xf32, #tpu.memory_space<vmem>>, vector<1x4x32xf32>
    %19 = vector.shape_cast %18 : vector<1x4x32xf32> to vector<4x32xf32>
    %20 = vector.shape_cast %17 : vector<4x32xf32> to vector<1x4x32xf32>
    tpu.vector_store %arg7[%c0_15, %c0_16, %c0_17], %20 {strides = array<i32>} : memref<1x4x32xf32, #tpu.memory_space<vmem>>, vector<1x4x32xf32>,
    return
  }
  func.func @transform_0(%arg0: i32) -> (i32, i32) {
    %c0_i32 = arith.constant 0 : i32
    %c0_i32_0 = arith.constant 0 : i32
    return %c0_i32, %arg0 : i32, i32
  }
  func.func @transform_1(%arg0: i32) -> (i32, i32) {
    %c0_i32 = arith.constant 0 : i32
    %c0_i32_0 = arith.constant 0 : i32
    %c0_i32_1 = arith.constant 0 : i32
    return %c0_i32, %c0_i32_0 : i32, i32
  }
  func.func @transform_2(%arg0: i32) -> (i32, i32) {
    %c0_i32 = arith.constant 0 : i32
    %c0_i32_0 = arith.constant 0 : i32
    %c0_i32_1 = arith.constant 0 : i32
    return %c0_i32, %c0_i32_0 : i32, i32
  }
  func.func @transform_3(%arg0: i32) -> (i32, i32) {
    %c0_i32 = arith.constant 0 : i32
    %c0_i32_0 = arith.constant 0 : i32
    %c0_i32_1 = arith.constant 0 : i32
    return %c0_i32, %c0_i32_0 : i32, i32
  }
  func.func @transform_4(%arg0: i32) -> (i32, i32) {
    %c0_i32 = arith.constant 0 : i32
    %c0_i32_0 = arith.constant 0 : i32
    %c0_i32_1 = arith.constant 0 : i32
    return %c0_i32, %c0_i32_0 : i32, i32
  }
  func.func @transform_5(%arg0: i32) -> (i32, i32) {
    %c0_i32 = arith.constant 0 : i32
    %c0_i32_0 = arith.constant 0 : i32
    %c0_i32_1 = arith.constant 0 : i32
    return %c0_i32, %c0_i32_0 : i32, i32
  }
  func.func @transform_6(%arg0: i32) -> (i32, i32, i32) {
    %c0_i32 = arith.constant 0 : i32
    %c0_i32_0 = arith.constant 0 : i32
    %c0_i32_1 = arith.constant 0 : i32
    return %arg0, %c0_i32, %c0_i32_0 : i32, i32, i32
  }
}

</mosaic_0001>

<llo_original>
// kernel: siamese_forward.1
$region0: #{siamese_forward.1}
  #allocation0 [shape = 'u32[]', space=smem, size = 0x4, offset = 0x4, fixed_abs, tag = 'smem constant byte address 0x4 - core index']
  #allocation1 [shape = 'u32[144,128]{1,0:T(1,128)}', space=vmem, size = 0x12000, scoped, tag = 'internal scratch']
  %s0 = inlined_call_operand.vmem [shape: bf16[36,2048], index: 0, kind: input, shape index: {}]
  %s1 = inlined_call_operand.vmem [shape: bf16[1024,4], index: 1, kind: input, shape index: {}]
  %s2 = inlined_call_operand.vmem [shape: bf16[8,36], index: 2, kind: input, shape index: {}]
  %s3 = inlined_call_operand.vmem [shape: f32[8,1], index: 3, kind: input, shape index: {}]
  %s4 = inlined_call_operand.vmem [shape: f32[8,32], index: 4, kind: input, shape index: {}]
  %s5 = inlined_call_operand.vmem [shape: f32[1,32], index: 5, kind: input, shape index: {}]
  %s6 = inlined_call_operand.vmem [shape: f32[2,4,32], index: 6, kind: output, shape index: {}]
  %s7 = sld [smem:[#allocation0]]
  $region80: #{siamese_forward.1} parent=0
    _
  %s9 = ssub.s32 1, %s7
  %s10 = scalar_select 0, %s9, %s7
  $region1: #{siamese_forward.1} parent=0
    #allocation2 [shape = 'u8[163840]{0}', space=vmem, size = 0x28000, scoped, tag = 'input window, operand 0']
    loop: start=0, step=1, limit=4
    $region2: #{siamese_forward.1} parent=1 // loop_pre_header
      _
    $region3: #{siamese_forward.1} parent=1 // loop_header
      %s12 = sphi 0, %s16
      %p13 = scmp.ge.s32.totalorder %s12, 4
      %s22 = sphi 0, %s24
      %s25 = sphi 0, %s22
      %s26 = sphi 0, %s25
      %s42 = sphi 0, %s26
      %s46 = sphi 0, %s46
      %s48 = sphi 0, %s46
      %s49 = sphi 0, %s48
      %s63 = sphi 0, %s49
      %s67 = sphi 0, %s67
      %s69 = sphi 0, %s67
      %s70 = sphi 0, %s69
      %s84 = sphi 0, %s70
      %s88 = sphi 0, %s88
      %s90 = sphi 0, %s88
      %s91 = sphi 0, %s90
      %s105 = sphi 0, %s91
      %s109 = sphi 0, %s109
      %s111 = sphi 0, %s109
      %s112 = sphi 0, %s111
      %s126 = sphi 0, %s112
      %s130 = sphi 0, %s130
      %s132 = sphi 0, %s130
      %s133 = sphi 0, %s132
      %s147 = sphi 0, %s133
      %s153 = sphi 0, %s155
      %s156 = sphi 0, %s153
      %s157 = sphi 0, %s156
      %s173 = sphi 0, %s157
    $region4: #{siamese_forward.1} parent=1 // loop_header_branch
      %15 = sbr.rel (%p13) target = $region8
    $region5: #{siamese_forward.1} parent=1 // loop_body
      %s17 = ssub.s32 %s12, 1
      %s18 = ssub.s32 %s12, 2
      %s19 = sadd.s32 %s12, 1
      %s20 = ssub.s32 %s12, %s19
      %p21 = scmp.eq.s32.totalorder %s20, 0
      %s23 = sadd.s32 %s22, 1
      %s24 = scalar_select %p21, %s22, %s23
      %p27 = pneg %p21
      %p28 = scmp.eq.s32.totalorder %s12, 1
      %p29 = por %p27, %p28
      %p30 = scmp.ne.s32.totalorder %s22, %s25
      %p31 = scmp.eq.s32.totalorder %s12, 0
      %p32 = por %p30, %p31
      %p33 = scmp.ne.s32.totalorder %s22, %s25
      %p34 = scmp.eq.s32.totalorder %s17, 1
      %p35 = por %p33, %p34
      %p36 = scmp.ne.s32.totalorder %s25, %s26
      %p37 = scmp.eq.s32.totalorder %s17, 0
      %p38 = por %p36, %p37
      %p39 = scmp.ne.s32.totalorder %s25, %s26
      %p40 = scmp.eq.s32.totalorder %s18, 1
      %p41 = por %p39, %p40
      %p43 = scmp.ne.s32.totalorder %s26, %s42
      %p44 = scmp.eq.s32.totalorder %s18, 0
      %p45 = por %p43, %p44
      %s47 = sadd.s32 %s46, 1
      %p50 = scmp.eq.s32.totalorder %s12, 1
      %p51 = scmp.ne.s32.totalorder %s46, %s48
      %p52 = scmp.eq.s32.totalorder %s12, 0
      %p53 = por %p51, %p52
      %p54 = scmp.ne.s32.totalorder %s46, %s48
      %p55 = scmp.eq.s32.totalorder %s17, 1
      %p56 = por %p54, %p55
      %p57 = scmp.ne.s32.totalorder %s48, %s49
      %p58 = scmp.eq.s32.totalorder %s17, 0
      %p59 = por %p57, %p58
      %p60 = scmp.ne.s32.totalorder %s48, %s49
      %p61 = scmp.eq.s32.totalorder %s18, 1
      %p62 = por %p60, %p61
      %p64 = scmp.ne.s32.totalorder %s49, %s63
      %p65 = scmp.eq.s32.totalorder %s18, 0
      %p66 = por %p64, %p65
      %s68 = sadd.s32 %s67, 1
      %p71 = scmp.eq.s32.totalorder %s12, 1
      %p72 = scmp.ne.s32.totalorder %s67, %s69
      %p73 = scmp.eq.s32.totalorder %s12, 0
      %p74 = por %p72, %p73
      %p75 = scmp.ne.s32.totalorder %s67, %s69
      %p76 = scmp.eq.s32.totalorder %s17, 1
      %p77 = por %p75, %p76
      %p78 = scmp.ne.s32.totalorder %s69, %s70
      %p79 = scmp.eq.s32.totalorder %s17, 0
      %p80 = por %p78, %p79
      %p81 = scmp.ne.s32.totalorder %s69, %s70
      %p82 = scmp.eq.s32.totalorder %s18, 1
      %p83 = por %p81, %p82
      %p85 = scmp.ne.s32.totalorder %s70, %s84
      %p86 = scmp.eq.s32.totalorder %s18, 0
      %p87 = por %p85, %p86
      %s89 = sadd.s32 %s88, 1
      %p92 = scmp.eq.s32.totalorder %s12, 1
      %p93 = scmp.ne.s32.totalorder %s88, %s90
      %p94 = scmp.eq.s32.totalorder %s12, 0
      %p95 = por %p93, %p94
      %p96 = scmp.ne.s32.totalorder %s88, %s90
      %p97 = scmp.eq.s32.totalorder %s17, 1
      %p98 = por %p96, %p97
      %p99 = scmp.ne.s32.totalorder %s90, %s91
      %p100 = scmp.eq.s32.totalorder %s17, 0
      %p101 = por %p99, %p100
      %p102 = scmp.ne.s32.totalorder %s90, %s91
      %p103 = scmp.eq.s32.totalorder %s18, 1
      %p104 = por %p102, %p103
      %p106 = scmp.ne.s32.totalorder %s91, %s105
      %p107 = scmp.eq.s32.totalorder %s18, 0
      %p108 = por %p106, %p107
      %s110 = sadd.s32 %s109, 1
      %p113 = scmp.eq.s32.totalorder %s12, 1
      %p114 = scmp.ne.s32.totalorder %s109, %s111
      %p115 = scmp.eq.s32.totalorder %s12, 0
      %p116 = por %p114, %p115
      %p117 = scmp.ne.s32.totalorder %s109, %s111
      %p118 = scmp.eq.s32.totalorder %s17, 1
      %p119 = por %p117, %p118
      %p120 = scmp.ne.s32.totalorder %s111, %s112
      %p121 = scmp.eq.s32.totalorder %s17, 0
      %p122 = por %p120, %p121
      %p123 = scmp.ne.s32.totalorder %s111, %s112
      %p124 = scmp.eq.s32.totalorder %s18, 1
      %p125 = por %p123, %p124
      %p127 = scmp.ne.s32.totalorder %s112, %s126
      %p128 = scmp.eq.s32.totalorder %s18, 0
      %p129 = por %p127, %p128
      %s131 = sadd.s32 %s130, 1
      %p134 = scmp.eq.s32.totalorder %s12, 1
      %p135 = scmp.ne.s32.totalorder %s130, %s132
      %p136 = scmp.eq.s32.totalorder %s12, 0
      %p137 = por %p135, %p136
      %p138 = scmp.ne.s32.totalorder %s130, %s132
      %p139 = scmp.eq.s32.totalorder %s17, 1
      %p140 = por %p138, %p139
      %p141 = scmp.ne.s32.totalorder %s132, %s133
      %p142 = scmp.eq.s32.totalorder %s17, 0
      %p143 = por %p141, %p142
      %p144 = scmp.ne.s32.totalorder %s132, %s133
      %p145 = scmp.eq.s32.totalorder %s18, 1
      %p146 = por %p144, %p145
      %p148 = scmp.ne.s32.totalorder %s133, %s147
      %p149 = scmp.eq.s32.totalorder %s18, 0
      %p150 = por %p148, %p149
      %s151 = ssub.s32 %s12, %s19
      %p152 = scmp.eq.s32.totalorder %s151, 0
      %s154 = sadd.s32 %s153, 1
      %s155 = scalar_select %p152, %s153, %s154
      %p158 = pneg %p152
      %p159 = scmp.eq.s32.totalorder %s12, 1
      %p160 = por %p158, %p159
      %p161 = scmp.ne.s32.totalorder %s153, %s156
      %p162 = scmp.eq.s32.totalorder %s12, 0
      %p163 = por %p161, %p162
      %p164 = scmp.ne.s32.totalorder %s153, %s156
      %p165 = scmp.eq.s32.totalorder %s17, 1
      %p166 = por %p164, %p165
      %p167 = scmp.ne.s32.totalorder %s156, %s157
      %p168 = scmp.eq.s32.totalorder %s17, 0
      %p169 = por %p167, %p168
      %p170 = scmp.ne.s32.totalorder %s156, %s157
      %p171 = scmp.eq.s32.totalorder %s18, 1
      %p172 = por %p170, %p171
      %p174 = scmp.ne.s32.totalorder %s157, %s173
      %p175 = scmp.eq.s32.totalorder %s18, 0
      %p176 = por %p174, %p175
      %p177 = scmp.le.s32.totalorder 1, %s12
      %p178 = scmp.lt.s32.totalorder %s12, 3
      %p179 = pnand %p177, %p178
      %p180 = pneg %p179
      // Predicated region
      $region9: #{siamese_forward.1} parent=5 // pred_check
        _
      $region10: #{siamese_forward.1} parent=5 // pred_check_branch
        %182 = sbr.rel (%p179) target = $region12
      $region11: #{siamese_forward.1} parent=5 // pred_region
        %s183 = ssub.s32 %s12, 1
        // Predicated region
        $region13: #{siamese_forward.1} parent=11 // pred_check
          %p184 = pneg %p59
        $region14: #{siamese_forward.1} parent=11 // pred_check_branch
          %186 = sbr.rel (%p184) target = $region16
        $region15: #{siamese_forward.1} parent=11 // pred_region
          _
        $region16: #{siamese_forward.1} parent=11 // pred_fallthru
          _
        // Predicated region
        $region17: #{siamese_forward.1} parent=11 // pred_check
          %p187 = pneg %p80
        $region18: #{siamese_forward.1} parent=11 // pred_check_branch
          %189 = sbr.rel (%p187) target = $region20
        $region19: #{siamese_forward.1} parent=11 // pred_region
          _
        $region20: #{siamese_forward.1} parent=11 // pred_fallthru
          _
        // Predicated region
        $region21: #{siamese_forward.1} parent=11 // pred_check
          %p190 = pneg %p101
        $region22: #{siamese_forward.1} parent=11 // pred_check_branch
          %192 = sbr.rel (%p190) target = $region24
        $region23: #{siamese_forward.1} parent=11 // pred_region
          _
        $region24: #{siamese_forward.1} parent=11 // pred_fallthru
          _
        // Predicated region
        $region25: #{siamese_forward.1} parent=11 // pred_check
          %p193 = pneg %p122
        $region26: #{siamese_forward.1} parent=11 // pred_check_branch
          %195 = sbr.rel (%p193) target = $region28
        $region27: #{siamese_forward.1} parent=11 // pred_region
          _
        $region28: #{siamese_forward.1} parent=11 // pred_fallthru
          _
        // Predicated region
        $region29: #{siamese_forward.1} parent=11 // pred_check
          %p196 = pneg %p143
        $region30: #{siamese_forward.1} parent=11 // pred_check_branch
          %198 = sbr.rel (%p196) target = $region32
        $region31: #{siamese_forward.1} parent=11 // pred_region
          _
        $region32: #{siamese_forward.1} parent=11 // pred_fallthru
          _
      $region12: #{siamese_forward.1} parent=5 // pred_fallthru
        _
      %p199 = scmp.lt.s32.totalorder %s12, 2
      // Predicated region
      $region33: #{siamese_forward.1} parent=5 // pred_check
        %p200 = pneg %p199
      $region34: #{siamese_forward.1} parent=5 // pred_check_branch
        %202 = sbr.rel (%p200) target = $region36
      $region35: #{siamese_forward.1} parent=5 // pred_region
        // Predicated region
        $region37: #{siamese_forward.1} parent=35 // pred_check
          %p203 = pneg %p32
        $region38: #{siamese_forward.1} parent=35 // pred_check_branch
          %205 = sbr.rel (%p203) target = $region40
        $region39: #{siamese_forward.1} parent=35 // pred_region
          %s206 = sand.u32 %s22, 1
          %s207 = sand.u32 %s22, 1
          %s208 = smul.addr %s207, 160
          %s209 = scalar_lea.vmem [#allocation2], %s208
          %s210 = smul.u32 8, %s12
          %s211 = smul.addr %s210, 4
          %s212 = scalar_lea.vmem %s0, %s211
          // Predicated region
          $region41: #{siamese_forward.1} parent=39 // pred_check
            _
          $region42: #{siamese_forward.1} parent=39 // pred_check_branch
            %214 = sbr.rel (0) target = $region44
          $region43: #{siamese_forward.1} parent=39 // pred_region
            // Predicated region
            $region45: #{siamese_forward.1} parent=43 // pred_check
              _
            $region46: #{siamese_forward.1} parent=43 // pred_check_branch
              %216 = sbr.rel (0) target = $region48
            $region47: #{siamese_forward.1} parent=43 // pred_region
              loop: start=0, step=1, limit=1
              $region49: #{siamese_forward.1} parent=47 // loop_pre_header
                _
              $region50: #{siamese_forward.1} parent=47 // loop_header
                %s218 = sphi 0, %s222
                %p219 = scmp.ge.s32.totalorder %s218, 1
                %s223 = sphi %s212, %s212
                %s224 = sphi %s209, %s209
              $region51: #{siamese_forward.1} parent=47 // loop_header_branch
                %221 = sbr.rel (%p219) target = $region55
              $region52: #{siamese_forward.1} parent=47 // loop_body
                %v225 = vld [vmem:[%s223] sm:$0xff]
                %226 = vst [vmem:[%s224] sm:$0xff] %v225
                %v227 = vld [vmem:[%s223 + $0x8] sm:$0xff]
                %228 = vst [vmem:[%s224 + $0x8] sm:$0xff] %v227
                %v229 = vld [vmem:[%s223 + $0x10] sm:$0xff]
                %230 = vst [vmem:[%s224 + $0x10] sm:$0xff] %v229
                %v231 = vld [vmem:[%s223 + $0x18] sm:$0xff]
                %232 = vst [vmem:[%s224 + $0x18] sm:$0xff] %v231
                %v233 = vld [vmem:[%s223 + $0x40] sm:$0xff]
                %234 = vst [vmem:[%s224 + $0x20] sm:$0xff] %v233
                %v235 = vld [vmem:[%s223 + $0x48] sm:$0xff]
                %236 = vst [vmem:[%s224 + $0x28] sm:$0xff] %v235
                %v237 = vld [vmem:[%s223 + $0x50] sm:$0xff]
                %238 = vst [vmem:[%s224 + $0x30] sm:$0xff] %v237
                %v239 = vld [vmem:[%s223 + $0x58] sm:$0xff]
                %240 = vst [vmem:[%s224 + $0x38] sm:$0xff] %v239
                %v241 = vld [vmem:[%s223 + $0x80] sm:$0xff]
                %242 = vst [vmem:[%s224 + $0x40] sm:$0xff] %v241
                %v243 = vld [vmem:[%s223 + $0x88] sm:$0xff]
                %244 = vst [vmem:[%s224 + $0x48] sm:$0xff] %v243
                %v245 = vld [vmem:[%s223 + $0x90] sm:$0xff]
                %246 = vst [vmem:[%s224 + $0x50] sm:$0xff] %v245
                %v247 = vld [vmem:[%s223 + $0x98] sm:$0xff]
                %248 = vst [vmem:[%s224 + $0x58] sm:$0xff] %v247
                %v249 = vld [vmem:[%s223 + $0xc0] sm:$0xff]
                %250 = vst [vmem:[%s224 + $0x60] sm:$0xff] %v249
                %v251 = vld [vmem:[%s223 + $0xc8] sm:$0xff]
                %252 = vst [vmem:[%s224 + $0x68] sm:$0xff] %v251
                %v253 = vld [vmem:[%s223 + $0xd0] sm:$0xff]
                %254 = vst [vmem:[%s224 + $0x70] sm:$0xff] %v253
                %v255 = vld [vmem:[%s223 + $0xd8] sm:$0xff]
                %256 = vst [vmem:[%s224 + $0x78] sm:$0xff] %v255
                %v257 = vld [vmem:[%s223 + $0x100] sm:$0xff]
                %258 = vst [vmem:[%s224 + $0x80] sm:$0xff] %v257
                %v259 = vld [vmem:[%s223 + $0x108] sm:$0xff]
                %260 = vst [vmem:[%s224 + $0x88] sm:$0xff] %v259
                %v261 = vld [vmem:[%s223 + $0x110] sm:$0xff]
                %262 = vst [vmem:[%s224 + $0x90] sm:$0xff] %v261
                %v263 = vld [vmem:[%s223 + $0x118] sm:$0xff]
                %264 = vst [vmem:[%s224 + $0x98] sm:$0xff] %v263
              $region53: #{siamese_forward.1} parent=47 // loop_footer
                %s222 = sadd.s32 1, %s218
              $region54: #{siamese_forward.1} parent=47 // loop_footer_branch
                %217 = sbr.rel target = $region50
              $region55: #{siamese_forward.1} parent=47 // loop_exit
                _
            $region48: #{siamese_forward.1} parent=43 // pred_fallthru
              _
            // Predicated region
            $region56: #{siamese_forward.1} parent=43 // pred_check
              _
            $region57: #{siamese_forward.1} parent=43 // pred_check_branch
              %266 = sbr.rel target = $region59
            $region58: #{siamese_forward.1} parent=43 // pred_region
              _
            $region59: #{siamese_forward.1} parent=43 // pred_fallthru
              _
          $region44: #{siamese_forward.1} parent=39 // pred_fallthru
            _
          %267 = vnop
        $region40: #{siamese_forward.1} parent=35 // pred_fallthru
          _
      $region36: #{siamese_forward.1} parent=5 // pred_fallthru
        _
      %p268 = scmp.le.s32.totalorder 1, %s12
      %p269 = scmp.lt.s32.totalorder %s12, 3
      %p270 = pnand %p268, %p269
      %p271 = pneg %p270
      // Predicated region
      $region60: #{siamese_forward.1} parent=5 // pred_check
        _
      $region61: #{siamese_forward.1} parent=5 // pred_check_branch
        %273 = sbr.rel (%p270) target = $region63
      $region62: #{siamese_forward.1} parent=5 // pred_region
        %s274 = ssub.s32 %s12, 1
        %s275 = sand.u32 %s25, 1
        %s276 = sand.u32 %s25, 1
        %s277 = smul.addr %s276, 160
        %s278 = scalar_lea.vmem [#allocation2], %s277
        // Predicated region
        $region64: #{siamese_forward.1} parent=62 // pred_check
          %p279 = pneg %p38
        $region65: #{siamese_forward.1} parent=62 // pred_check_branch
          %281 = sbr.rel (%p279) target = $region67
        $region66: #{siamese_forward.1} parent=62 // pred_region
          _
        $region67: #{siamese_forward.1} parent=62 // pred_fallthru
          _
        %s282 = sand.u32 %s25, 1
        %s283 = sand.u32 %s25, 1
        %s284 = smul.addr %s283, 160
        %s285 = scalar_lea.vmem [#allocation2], %s284
        %p286 = pneg %p38
        %p287 = pneg %p35
        %p288 = pneg %p59
        %p289 = pneg %p56
        %p290 = pneg %p80
        %p291 = pneg %p77
        %p292 = pneg %p101
        %p293 = pneg %p98
        %p294 = pneg %p122
        %p295 = pneg %p119
        %p296 = pneg %p143
        %p297 = pneg %p140
        %p298 = pneg %p169
        %p299 = pneg %p166
        %p300 = scmp.lt.s32.totalorder %s17, 1
        %s301 = scalar_select %p300, %s17, 1
        %s302 = smul.addr %s301, 4
        %s303 = scalar_lea.vmem %s6, %s302
        %s304 = smul.u32 8, %s17
        %p305 = scmp.lt.s32.totalorder %s17, 1
        %s306 = scalar_select %p305, %s17, 1
        %s307 = smul.addr %s306, 4
        %s308 = scalar_lea.vmem %s6, %s307
        %v310 = vld [vmem:[%s2] sm:$0xf]
        %v311 = vld [vmem:[%s278] sm:$0xff]
        %v312 = vld [vmem:[%s278 + $0x8] sm:$0xff]
        %v313 = vld [vmem:[%s278 + $0x10] sm:$0xff]
        %v314 = vld [vmem:[%s278 + $0x18] sm:$0xff]
        %v315 = vld [vmem:[%s278 + $0x20] sm:$0xff]
        %v316 = vld [vmem:[%s278 + $0x28] sm:$0xff]
        %v317 = vld [vmem:[%s278 + $0x30] sm:$0xff]
        %v318 = vld [vmem:[%s278 + $0x38] sm:$0xff]
        %v319 = vld [vmem:[%s278 + $0x40] sm:$0xff]
        %v320 = vld [vmem:[%s278 + $0x48] sm:$0xff]
        %v321 = vld [vmem:[%s278 + $0x50] sm:$0xff]
        %v322 = vld [vmem:[%s278 + $0x58] sm:$0xff]
        %v323 = vld [vmem:[%s278 + $0x60] sm:$0xff]
        %v324 = vld [vmem:[%s278 + $0x68] sm:$0xff]
        %v325 = vld [vmem:[%s278 + $0x70] sm:$0xff]
        %v326 = vld [vmem:[%s278 + $0x78] sm:$0xff]
        %v327 = vld [vmem:[%s278 + $0x80] sm:$0x33]
        %v328 = vld [vmem:[%s278 + $0x88] sm:$0x33]
        %v329 = vld [vmem:[%s278 + $0x90] sm:$0x33]
        %v330 = vld [vmem:[%s278 + $0x98] sm:$0x33]
        %v331 = vld [vmem:[%s3] sm:$0xff]
        %333 = vset.pattern.permute.xlu0 0
        %334 = vperm.xlu0 %333, %v331
        %v335 = vpop.permute.xlu0 %334
        %v357 = vunpack.c.l.b16 %v311
        %v358 = vunpack.c.h.b16 %v311
        %v359 = vunpack.c.l.b16 %v312
        %v360 = vunpack.c.h.b16 %v312
        %v361 = vunpack.c.l.b16 %v313
        %v362 = vunpack.c.h.b16 %v313
        %v363 = vunpack.c.l.b16 %v314
        %v364 = vunpack.c.h.b16 %v314
        %v365 = vunpack.c.l.b16 %v315
        %v366 = vunpack.c.h.b16 %v315
        %v367 = vunpack.c.l.b16 %v316
        %v368 = vunpack.c.h.b16 %v316
        %v369 = vunpack.c.l.b16 %v317
        %v370 = vunpack.c.h.b16 %v317
        %v371 = vunpack.c.l.b16 %v318
        %v372 = vunpack.c.h.b16 %v318
        %v373 = vunpack.c.l.b16 %v319
        %v374 = vunpack.c.h.b16 %v319
        %v375 = vunpack.c.l.b16 %v320
        %v376 = vunpack.c.h.b16 %v320
        %v377 = vunpack.c.l.b16 %v321
        %v378 = vunpack.c.h.b16 %v321
        %v379 = vunpack.c.l.b16 %v322
        %v380 = vunpack.c.h.b16 %v322
        %v381 = vunpack.c.l.b16 %v323
        %v382 = vunpack.c.h.b16 %v323
        %v383 = vunpack.c.l.b16 %v324
        %v384 = vunpack.c.h.b16 %v324
        %v385 = vunpack.c.l.b16 %v325
        %v386 = vunpack.c.h.b16 %v325
        %v387 = vunpack.c.l.b16 %v326
        %v388 = vunpack.c.h.b16 %v326
        %v389 = vunpack.c.l.b16 %v327
        %v390 = vunpack.c.h.b16 %v327
        %v391 = vunpack.c.l.b16 %v328
        %v392 = vunpack.c.h.b16 %v328
        %v393 = vunpack.c.l.b16 %v329
        %v394 = vunpack.c.h.b16 %v329
        %v395 = vunpack.c.l.b16 %v330
        %v396 = vunpack.c.h.b16 %v330
        %v397 = vpack.c.b16 %v365, %v357
        %v398 = vpack.c.b16 %v366, %v358
        %v399 = vpack.c.b16 %v367, %v359
        %v400 = vpack.c.b16 %v368, %v360
        %v401 = vpack.c.b16 %v369, %v361
        %v402 = vpack.c.b16 %v370, %v362
        %v403 = vpack.c.b16 %v371, %v363
        %v404 = vpack.c.b16 %v372, %v364
        %v405 = vpack.c.b16 %v381, %v373
        %v406 = vpack.c.b16 %v382, %v374
        %v407 = vpack.c.b16 %v383, %v375
        %v408 = vpack.c.b16 %v384, %v376
        %v409 = vpack.c.b16 %v385, %v377
        %v410 = vpack.c.b16 %v386, %v378
        %v411 = vpack.c.b16 %v387, %v379
        %v412 = vpack.c.b16 %v388, %v380
        %v413 = vpack.c.b16 %v389, %v389
        %v414 = vpack.c.b16 %v390, %v390
        %v415 = vpack.c.b16 %v391, %v391
        %v416 = vpack.c.b16 %v392, %v392
        %v417 = vpack.c.b16 %v393, %v393
        %v418 = vpack.c.b16 %v394, %v394
        %v419 = vpack.c.b16 %v395, %v395
        %v420 = vpack.c.b16 %v396, %v396
        %vm437 = vcmask 293888
        %v439 = vsel %vm437, %v310, 0
        %vm441 = vcmask 1041408
        %v443 = vsel %vm441, %v413, 0
        %v446 = vsel %vm441, %v414, 0
        %v449 = vsel %vm441, %v415, 0
        %v452 = vsel %vm441, %v416, 0
        %v455 = vsel %vm441, %v417, 0
        %v458 = vsel %vm441, %v418, 0
        %v461 = vsel %vm441, %v419, 0
        %v464 = vsel %vm441, %v420, 0
        %466 = vmatprep.subr.bf16.mxu0 %v398
        %467 = vmatpush1.bf16.msra.mxu0 %v397
        %468 = vmatprep.subr.bf16.mxu0 %v406
        %469 = vmatpush1.bf16.msra.mxu0 %v405
        %470 = vmatprep.subr.bf16.mxu0 %v446
        %471 = vmatpush1.bf16.msra.mxu0 %v443
        %472 = vmatprep.subr.bf16.mxu0 0
        %473 = vmatpush1.bf16.msra.mxu0 0
        %474 = vmatprep.subr.bf16.mxu0 0
        %475 = vmatpush1.bf16.msra.mxu0 0
        %476 = vmatprep.subr.bf16.mxu0 0
        %477 = vmatpush1.bf16.msra.mxu0 0
        %478 = vmatprep.subr.bf16.mxu0 0
        %479 = vmatpush1.bf16.msra.mxu0 0
        %480 = vmatprep.subr.bf16.mxu0 0
        %481 = vmatpush1.bf16.msra.mxu0 0
        %482 = vmatprep.subr.bf16.mxu0 0
        %483 = vmatpush1.bf16.msra.mxu0 0
        %484 = vmatprep.subr.bf16.mxu0 0
        %485 = vmatpush1.bf16.msra.mxu0 0
        %486 = vmatprep.subr.bf16.mxu0 0
        %487 = vmatpush1.bf16.msra.mxu0 0
        %488 = vmatprep.subr.bf16.mxu0 0
        %489 = vmatpush1.bf16.msra.mxu0 0
        %490 = vmatprep.subr.bf16.mxu0 0
        %491 = vmatpush1.bf16.msra.mxu0 0
        %492 = vmatprep.subr.bf16.mxu0 0
        %493 = vmatpush1.bf16.msra.mxu0 0
        %494 = vmatprep.subr.bf16.mxu0 0
        %495 = vmatpush1.bf16.msra.mxu0 0
        %496 = vmatprep.subr.bf16.mxu0 0
        %497 = vmatpush1.bf16.msra.mxu0 0
        %498 = vmatprep.mubr.bf16.mxu0 0
        %499 = vmatmul.mubr.bf16.gmra.mrb[0].mxu0 %v439
        %v500 = vpop.f32.mrb[0].mxu0
        %v501 = vadd.f32 %v335, %v500
        %v502 = vpop.f32.mrb[0].mxu0
        %v503 = vadd.f32 %v335, %v502
        %v504 = vpop.f32.mrb[0].mxu0
        %v505 = vpop.f32.mrb[0].mxu0
        %506 = vdwg.mxu0
        %507 = vmatprep.subr.bf16.mxu0 %v400
        %508 = vmatpush1.bf16.msra.mxu0 %v399
        %509 = vmatprep.subr.bf16.mxu0 %v408
        %510 = vmatpush1.bf16.msra.mxu0 %v407
        %511 = vmatprep.subr.bf16.mxu0 %v452
        %512 = vmatpush1.bf16.msra.mxu0 %v449
        %513 = vmatprep.subr.bf16.mxu0 0
        %514 = vmatpush1.bf16.msra.mxu0 0
        %515 = vmatprep.subr.bf16.mxu0 0
        %516 = vmatpush1.bf16.msra.mxu0 0
        %517 = vmatprep.subr.bf16.mxu0 0
        %518 = vmatpush1.bf16.msra.mxu0 0
        %519 = vmatprep.subr.bf16.mxu0 0
        %520 = vmatpush1.bf16.msra.mxu0 0
        %521 = vmatprep.subr.bf16.mxu0 0
        %522 = vmatpush1.bf16.msra.mxu0 0
        %523 = vmatprep.subr.bf16.mxu0 0
        %524 = vmatpush1.bf16.msra.mxu0 0
        %525 = vmatprep.subr.bf16.mxu0 0
        %526 = vmatpush1.bf16.msra.mxu0 0
        %527 = vmatprep.subr.bf16.mxu0 0
        %528 = vmatpush1.bf16.msra.mxu0 0
        %529 = vmatprep.subr.bf16.mxu0 0
        %530 = vmatpush1.bf16.msra.mxu0 0
        %531 = vmatprep.subr.bf16.mxu0 0
        %532 = vmatpush1.bf16.msra.mxu0 0
        %533 = vmatprep.subr.bf16.mxu0 0
        %534 = vmatpush1.bf16.msra.mxu0 0
        %535 = vmatprep.subr.bf16.mxu0 0
        %536 = vmatpush1.bf16.msra.mxu0 0
        %537 = vmatprep.subr.bf16.mxu0 0
        %538 = vmatpush1.bf16.msra.mxu0 0
        %539 = vmatprep.mubr.bf16.mxu0 0
        %540 = vmatmul.mubr.bf16.gmra.mrb[0].mxu0 %v439
        %v541 = vpop.f32.mrb[0].mxu0
        %v542 = vadd.f32 %v335, %v541
        %v543 = vpop.f32.mrb[0].mxu0
        %v544 = vadd.f32 %v335, %v543
        %v545 = vpop.f32.mrb[0].mxu0
        %v546 = vpop.f32.mrb[0].mxu0
        %547 = vdwg.mxu0
        %548 = vmatprep.subr.bf16.mxu0 %v402
        %549 = vmatpush1.bf16.msra.mxu0 %v401
        %550 = vmatprep.subr.bf16.mxu0 %v410
        %551 = vmatpush1.bf16.msra.mxu0 %v409
        %552 = vmatprep.subr.bf16.mxu0 %v458
        %553 = vmatpush1.bf16.msra.mxu0 %v455
        %554 = vmatprep.subr.bf16.mxu0 0
        %555 = vmatpush1.bf16.msra.mxu0 0
        %556 = vmatprep.subr.bf16.mxu0 0
        %557 = vmatpush1.bf16.msra.mxu0 0
        %558 = vmatprep.subr.bf16.mxu0 0
        %559 = vmatpush1.bf16.msra.mxu0 0
        %560 = vmatprep.subr.bf16.mxu0 0
        %561 = vmatpush1.bf16.msra.mxu0 0
        %562 = vmatprep.subr.bf16.mxu0 0
        %563 = vmatpush1.bf16.msra.mxu0 0
        %564 = vmatprep.subr.bf16.mxu0 0
        %565 = vmatpush1.bf16.msra.mxu0 0
        %566 = vmatprep.subr.bf16.mxu0 0
        %567 = vmatpush1.bf16.msra.mxu0 0
        %568 = vmatprep.subr.bf16.mxu0 0
        %569 = vmatpush1.bf16.msra.mxu0 0
        %570 = vmatprep.subr.bf16.mxu0 0
        %571 = vmatpush1.bf16.msra.mxu0 0
        %572 = vmatprep.subr.bf16.mxu0 0
        %573 = vmatpush1.bf16.msra.mxu0 0
        %574 = vmatprep.subr.bf16.mxu0 0
        %575 = vmatpush1.bf16.msra.mxu0 0
        %576 = vmatprep.subr.bf16.mxu0 0
        %577 = vmatpush1.bf16.msra.mxu0 0
        %578 = vmatprep.subr.bf16.mxu0 0
        %579 = vmatpush1.bf16.msra.mxu0 0
        %580 = vmatprep.mubr.bf16.mxu0 0
        %581 = vmatmul.mubr.bf16.gmra.mrb[0].mxu0 %v439
        %v582 = vpop.f32.mrb[0].mxu0
        %v583 = vadd.f32 %v335, %v582
        %v584 = vpop.f32.mrb[0].mxu0
        %v585 = vadd.f32 %v335, %v584
        %v586 = vpop.f32.mrb[0].mxu0
        %v587 = vpop.f32.mrb[0].mxu0
        %588 = vdwg.mxu0
        %589 = vmatprep.subr.bf16.mxu0 %v404
        %590 = vmatpush1.bf16.msra.mxu0 %v403
        %591 = vmatprep.subr.bf16.mxu0 %v412
        %592 = vmatpush1.bf16.msra.mxu0 %v411
        %593 = vmatprep.subr.bf16.mxu0 %v464
        %594 = vmatpush1.bf16.msra.mxu0 %v461
        %595 = vmatprep.subr.bf16.mxu0 0
        %596 = vmatpush1.bf16.msra.mxu0 0
        %597 = vmatprep.subr.bf16.mxu0 0
        %598 = vmatpush1.bf16.msra.mxu0 0
        %599 = vmatprep.subr.bf16.mxu0 0
        %600 = vmatpush1.bf16.msra.mxu0 0
        %601 = vmatprep.subr.bf16.mxu0 0
        %602 = vmatpush1.bf16.msra.mxu0 0
        %603 = vmatprep.subr.bf16.mxu0 0
        %604 = vmatpush1.bf16.msra.mxu0 0
        %605 = vmatprep.subr.bf16.mxu0 0
        %606 = vmatpush1.bf16.msra.mxu0 0
        %607 = vmatprep.subr.bf16.mxu0 0
        %608 = vmatpush1.bf16.msra.mxu0 0
        %609 = vmatprep.subr.bf16.mxu0 0
        %610 = vmatpush1.bf16.msra.mxu0 0
        %611 = vmatprep.subr.bf16.mxu0 0
        %612 = vmatpush1.bf16.msra.mxu0 0
        %613 = vmatprep.subr.bf16.mxu0 0
        %614 = vmatpush1.bf16.msra.mxu0 0
        %615 = vmatprep.subr.bf16.mxu0 0
        %616 = vmatpush1.bf16.msra.mxu0 0
        %617 = vmatprep.subr.bf16.mxu0 0
        %618 = vmatpush1.bf16.msra.mxu0 0
        %619 = vmatprep.subr.bf16.mxu0 0
        %620 = vmatpush1.bf16.msra.mxu0 0
        %621 = vmatprep.mubr.bf16.mxu0 0
        %622 = vmatmul.mubr.bf16.gmra.mrb[0].mxu0 %v439
        %v623 = vpop.f32.mrb[0].mxu0
        %v624 = vadd.f32 %v335, %v623
        %v625 = vpop.f32.mrb[0].mxu0
        %v626 = vadd.f32 %v335, %v625
        %v627 = vpop.f32.mrb[0].mxu0
        %v628 = vpop.f32.mrb[0].mxu0
        %629 = vdwg.mxu0
        %v630 = vmax.f32 %v501, 0.0
        %v631 = vmax.f32 %v503, 0.0
        %v632 = vmax.f32 %v542, 0.0
        %v633 = vmax.f32 %v544, 0.0
        %v634 = vmax.f32 %v583, 0.0
        %v635 = vmax.f32 %v585, 0.0
        %v636 = vmax.f32 %v624, 0.0
        %v637 = vmax.f32 %v626, 0.0
        %v638 = vpack.c.bf16 %v630, %v630
        %v639 = vpack.c.bf16 %v631, %v631
        %v640 = vpack.c.bf16 %v632, %v632
        %v641 = vpack.c.bf16 %v633, %v633
        %v642 = vpack.c.bf16 %v634, %v634
        %v643 = vpack.c.bf16 %v635, %v635
        %v644 = vpack.c.bf16 %v636, %v636
        %v645 = vpack.c.bf16 %v637, %v637
        %v646 = vld [vmem:[%s1] sm:$0xf]
        %v647 = vld [vmem:[%s1 + $0x4] sm:$0xf]
        %v648 = vld [vmem:[%s1 + $0x8] sm:$0xf]
        %v649 = vld [vmem:[%s1 + $0xc] sm:$0xf]
        %v650 = vld [vmem:[%s1 + $0x10] sm:$0xf]
        %v651 = vld [vmem:[%s1 + $0x14] sm:$0xf]
        %v652 = vld [vmem:[%s1 + $0x18] sm:$0xf]
        %v653 = vld [vmem:[%s1 + $0x1c] sm:$0xf]
        %v654 = vld [vmem:[%s1 + $0x20] sm:$0xf]
        %v655 = vld [vmem:[%s1 + $0x24] sm:$0xf]
        %v656 = vld [vmem:[%s1 + $0x28] sm:$0xf]
        %v657 = vld [vmem:[%s1 + $0x2c] sm:$0xf]
        %v658 = vld [vmem:[%s1 + $0x30] sm:$0xf]
        %v659 = vld [vmem:[%s1 + $0x34] sm:$0xf]
        %v660 = vld [vmem:[%s1 + $0x38] sm:$0xf]
        %v661 = vld [vmem:[%s1 + $0x3c] sm:$0xf]
        %v662 = vld [vmem:[%s1 + $0x40] sm:$0xf]
        %v663 = vld [vmem:[%s1 + $0x44] sm:$0xf]
        %v664 = vld [vmem:[%s1 + $0x48] sm:$0xf]
        %v665 = vld [vmem:[%s1 + $0x4c] sm:$0xf]
        %v666 = vld [vmem:[%s1 + $0x50] sm:$0xf]
        %v667 = vld [vmem:[%s1 + $0x54] sm:$0xf]
        %v668 = vld [vmem:[%s1 + $0x58] sm:$0xf]
        %v669 = vld [vmem:[%s1 + $0x5c] sm:$0xf]
        %v670 = vld [vmem:[%s1 + $0x60] sm:$0xf]
        %v671 = vld [vmem:[%s1 + $0x64] sm:$0xf]
        %v672 = vld [vmem:[%s1 + $0x68] sm:$0xf]
        %v673 = vld [vmem:[%s1 + $0x6c] sm:$0xf]
        %v674 = vld [vmem:[%s1 + $0x70] sm:$0xf]
        %v675 = vld [vmem:[%s1 + $0x74] sm:$0xf]
        %v676 = vld [vmem:[%s1 + $0x78] sm:$0xf]
        %v677 = vld [vmem:[%s1 + $0x7c] sm:$0xf]
        %v678 = vld [vmem:[%s1 + $0x80] sm:$0xf]
        %v679 = vld [vmem:[%s1 + $0x84] sm:$0xf]
        %v680 = vld [vmem:[%s1 + $0x88] sm:$0xf]
        %v681 = vld [vmem:[%s1 + $0x8c] sm:$0xf]
        %v682 = vld [vmem:[%s1 + $0x90] sm:$0xf]
        %v683 = vld [vmem:[%s1 + $0x94] sm:$0xf]
        %v684 = vld [vmem:[%s1 + $0x98] sm:$0xf]
        %v685 = vld [vmem:[%s1 + $0x9c] sm:$0xf]
        %v686 = vld [vmem:[%s1 + $0xa0] sm:$0xf]
        %v687 = vld [vmem:[%s1 + $0xa4] sm:$0xf]
        %v688 = vld [vmem:[%s1 + $0xa8] sm:$0xf]
        %v689 = vld [vmem:[%s1 + $0xac] sm:$0xf]
        %v690 = vld [vmem:[%s1 + $0xb0] sm:$0xf]
        %v691 = vld [vmem:[%s1 + $0xb4] sm:$0xf]
        %v692 = vld [vmem:[%s1 + $0xb8] sm:$0xf]
        %v693 = vld [vmem:[%s1 + $0xbc] sm:$0xf]
        %v694 = vld [vmem:[%s1 + $0xc0] sm:$0xf]
        %v695 = vld [vmem:[%s1 + $0xc4] sm:$0xf]
        %v696 = vld [vmem:[%s1 + $0xc8] sm:$0xf]
        %v697 = vld [vmem:[%s1 + $0xcc] sm:$0xf]
        %v698 = vld [vmem:[%s1 + $0xd0] sm:$0xf]
        %v699 = vld [vmem:[%s1 + $0xd4] sm:$0xf]
        %v700 = vld [vmem:[%s1 + $0xd8] sm:$0xf]
        %v701 = vld [vmem:[%s1 + $0xdc] sm:$0xf]
        %v702 = vld [vmem:[%s1 + $0xe0] sm:$0xf]
        %v703 = vld [vmem:[%s1 + $0xe4] sm:$0xf]
        %v704 = vld [vmem:[%s1 + $0xe8] sm:$0xf]
        %v705 = vld [vmem:[%s1 + $0xec] sm:$0xf]
        %v706 = vld [vmem:[%s1 + $0xf0] sm:$0xf]
        %v707 = vld [vmem:[%s1 + $0xf4] sm:$0xf]
        %v708 = vld [vmem:[%s1 + $0xf8] sm:$0xf]
        %v709 = vld [vmem:[%s1 + $0xfc] sm:$0xf]
        %v710 = vld [vmem:[%s1 + $0x100] sm:$0xf]
        %v711 = vld [vmem:[%s1 + $0x104] sm:$0xf]
        %v712 = vld [vmem:[%s1 + $0x108] sm:$0xf]
        %v713 = vld [vmem:[%s1 + $0x10c] sm:$0xf]
        %v714 = vld [vmem:[%s1 + $0x110] sm:$0xf]
        %v715 = vld [vmem:[%s1 + $0x114] sm:$0xf]
        %v716 = vld [vmem:[%s1 + $0x118] sm:$0xf]
        %v717 = vld [vmem:[%s1 + $0x11c] sm:$0xf]
        %v718 = vld [vmem:[%s1 + $0x120] sm:$0xf]
        %v719 = vld [vmem:[%s1 + $0x124] sm:$0xf]
        %v720 = vld [vmem:[%s1 + $0x128] sm:$0xf]
        %v721 = vld [vmem:[%s1 + $0x12c] sm:$0xf]
        %v722 = vld [vmem:[%s1 + $0x130] sm:$0xf]
        %v723 = vld [vmem:[%s1 + $0x134] sm:$0xf]
        %v724 = vld [vmem:[%s1 + $0x138] sm:$0xf]
        %v725 = vld [vmem:[%s1 + $0x13c] sm:$0xf]
        %v726 = vld [vmem:[%s1 + $0x140] sm:$0xf]
        %v727 = vld [vmem:[%s1 + $0x144] sm:$0xf]
        %v728 = vld [vmem:[%s1 + $0x148] sm:$0xf]
        %v729 = vld [vmem:[%s1 + $0x14c] sm:$0xf]
        %v730 = vld [vmem:[%s1 + $0x150] sm:$0xf]
        %v731 = vld [vmem:[%s1 + $0x154] sm:$0xf]
        %v732 = vld [vmem:[%s1 + $0x158] sm:$0xf]
        %v733 = vld [vmem:[%s1 + $0x15c] sm:$0xf]
        %v734 = vld [vmem:[%s1 + $0x160] sm:$0xf]
        %v735 = vld [vmem:[%s1 + $0x164] sm:$0xf]
        %v736 = vld [vmem:[%s1 + $0x168] sm:$0xf]
        %v737 = vld [vmem:[%s1 + $0x16c] sm:$0xf]
        %v738 = vld [vmem:[%s1 + $0x170] sm:$0xf]
        %v739 = vld [vmem:[%s1 + $0x174] sm:$0xf]
        %v740 = vld [vmem:[%s1 + $0x178] sm:$0xf]
        %v741 = vld [vmem:[%s1 + $0x17c] sm:$0xf]
        %v742 = vld [vmem:[%s1 + $0x180] sm:$0xf]
        %v743 = vld [vmem:[%s1 + $0x184] sm:$0xf]
        %v744 = vld [vmem:[%s1 + $0x188] sm:$0xf]
        %v745 = vld [vmem:[%s1 + $0x18c] sm:$0xf]
        %v746 = vld [vmem:[%s1 + $0x190] sm:$0xf]
        %v747 = vld [vmem:[%s1 + $0x194] sm:$0xf]
        %v748 = vld [vmem:[%s1 + $0x198] sm:$0xf]
        %v749 = vld [vmem:[%s1 + $0x19c] sm:$0xf]
        %v750 = vld [vmem:[%s1 + $0x1a0] sm:$0xf]
        %v751 = vld [vmem:[%s1 + $0x1a4] sm:$0xf]
        %v752 = vld [vmem:[%s1 + $0x1a8] sm:$0xf]
        %v753 = vld [vmem:[%s1 + $0x1ac] sm:$0xf]
        %v754 = vld [vmem:[%s1 + $0x1b0] sm:$0xf]
        %v755 = vld [vmem:[%s1 + $0x1b4] sm:$0xf]
        %v756 = vld [vmem:[%s1 + $0x1b8] sm:$0xf]
        %v757 = vld [vmem:[%s1 + $0x1bc] sm:$0xf]
        %v758 = vld [vmem:[%s1 + $0x1c0] sm:$0xf]
        %v759 = vld [vmem:[%s1 + $0x1c4] sm:$0xf]
        %v760 = vld [vmem:[%s1 + $0x1c8] sm:$0xf]
        %v761 = vld [vmem:[%s1 + $0x1cc] sm:$0xf]
        %v762 = vld [vmem:[%s1 + $0x1d0] sm:$0xf]
        %v763 = vld [vmem:[%s1 + $0x1d4] sm:$0xf]
        %v764 = vld [vmem:[%s1 + $0x1d8] sm:$0xf]
        %v765 = vld [vmem:[%s1 + $0x1dc] sm:$0xf]
        %v766 = vld [vmem:[%s1 + $0x1e0] sm:$0xf]
        %v767 = vld [vmem:[%s1 + $0x1e4] sm:$0xf]
        %v768 = vld [vmem:[%s1 + $0x1e8] sm:$0xf]
        %v769 = vld [vmem:[%s1 + $0x1ec] sm:$0xf]
        %v770 = vld [vmem:[%s1 + $0x1f0] sm:$0xf]
        %v771 = vld [vmem:[%s1 + $0x1f4] sm:$0xf]
        %v772 = vld [vmem:[%s1 + $0x1f8] sm:$0xf]
        %v773 = vld [vmem:[%s1 + $0x1fc] sm:$0xf]
        %v902 = vunpack.c.l.b16 %v646
        %v903 = vunpack.c.l.b16 %v647
        %v904 = vunpack.c.l.b16 %v648
        %v905 = vunpack.c.l.b16 %v649
        %v906 = vunpack.c.l.b16 %v650
        %v907 = vunpack.c.l.b16 %v651
        %v908 = vunpack.c.l.b16 %v652
        %v909 = vunpack.c.l.b16 %v653
        %v910 = vunpack.c.l.b16 %v654
        %v911 = vunpack.c.l.b16 %v655
        %v912 = vunpack.c.l.b16 %v656
        %v913 = vunpack.c.l.b16 %v657
        %v914 = vunpack.c.l.b16 %v658
        %v915 = vunpack.c.l.b16 %v659
        %v916 = vunpack.c.l.b16 %v660
        %v917 = vunpack.c.l.b16 %v661
        %v918 = vunpack.c.l.b16 %v662
        %v919 = vunpack.c.l.b16 %v663
        %v920 = vunpack.c.l.b16 %v664
        %v921 = vunpack.c.l.b16 %v665
        %v922 = vunpack.c.l.b16 %v666
        %v923 = vunpack.c.l.b16 %v667
        %v924 = vunpack.c.l.b16 %v668
        %v925 = vunpack.c.l.b16 %v669
        %v926 = vunpack.c.l.b16 %v670
        %v927 = vunpack.c.l.b16 %v671
        %v928 = vunpack.c.l.b16 %v672
        %v929 = vunpack.c.l.b16 %v673
        %v930 = vunpack.c.l.b16 %v674
        %v931 = vunpack.c.l.b16 %v675
        %v932 = vunpack.c.l.b16 %v676
        %v933 = vunpack.c.l.b16 %v677
        %v934 = vunpack.c.l.b16 %v678
        %v935 = vunpack.c.l.b16 %v679
        %v936 = vunpack.c.l.b16 %v680
        %v937 = vunpack.c.l.b16 %v681
        %v938 = vunpack.c.l.b16 %v682
        %v939 = vunpack.c.l.b16 %v683
        %v940 = vunpack.c.l.b16 %v684
        %v941 = vunpack.c.l.b16 %v685
        %v942 = vunpack.c.l.b16 %v686
        %v943 = vunpack.c.l.b16 %v687
        %v944 = vunpack.c.l.b16 %v688
        %v945 = vunpack.c.l.b16 %v689
        %v946 = vunpack.c.l.b16 %v690
        %v947 = vunpack.c.l.b16 %v691
        %v948 = vunpack.c.l.b16 %v692
        %v949 = vunpack.c.l.b16 %v693
        %v950 = vunpack.c.l.b16 %v694
        %v951 = vunpack.c.l.b16 %v695
        %v952 = vunpack.c.l.b16 %v696
        %v953 = vunpack.c.l.b16 %v697
        %v954 = vunpack.c.l.b16 %v698
        %v955 = vunpack.c.l.b16 %v699
        %v956 = vunpack.c.l.b16 %v700
        %v957 = vunpack.c.l.b16 %v701
        %v958 = vunpack.c.l.b16 %v702
        %v959 = vunpack.c.l.b16 %v703
        %v960 = vunpack.c.l.b16 %v704
        %v961 = vunpack.c.l.b16 %v705
        %v962 = vunpack.c.l.b16 %v706
        %v963 = vunpack.c.l.b16 %v707
        %v964 = vunpack.c.l.b16 %v708
        %v965 = vunpack.c.l.b16 %v709
        %v966 = vunpack.c.l.b16 %v710
        %v967 = vunpack.c.l.b16 %v711
        %v968 = vunpack.c.l.b16 %v712
        %v969 = vunpack.c.l.b16 %v713
        %v970 = vunpack.c.l.b16 %v714
        %v971 = vunpack.c.l.b16 %v715
        %v972 = vunpack.c.l.b16 %v716
        %v973 = vunpack.c.l.b16 %v717
        %v974 = vunpack.c.l.b16 %v718
        %v975 = vunpack.c.l.b16 %v719
        %v976 = vunpack.c.l.b16 %v720
        %v977 = vunpack.c.l.b16 %v721
        %v978 = vunpack.c.l.b16 %v722
        %v979 = vunpack.c.l.b16 %v723
        %v980 = vunpack.c.l.b16 %v724
        %v981 = vunpack.c.l.b16 %v725
        %v982 = vunpack.c.l.b16 %v726
        %v983 = vunpack.c.l.b16 %v727
        %v984 = vunpack.c.l.b16 %v728
        %v985 = vunpack.c.l.b16 %v729
        %v986 = vunpack.c.l.b16 %v730
        %v987 = vunpack.c.l.b16 %v731
        %v988 = vunpack.c.l.b16 %v732
        %v989 = vunpack.c.l.b16 %v733
        %v990 = vunpack.c.l.b16 %v734
        %v991 = vunpack.c.l.b16 %v735
        %v992 = vunpack.c.l.b16 %v736
        %v993 = vunpack.c.l.b16 %v737
        %v994 = vunpack.c.l.b16 %v738
        %v995 = vunpack.c.l.b16 %v739
        %v996 = vunpack.c.l.b16 %v740
        %v997 = vunpack.c.l.b16 %v741
        %v998 = vunpack.c.l.b16 %v742
        %v999 = vunpack.c.l.b16 %v743
        %v1000 = vunpack.c.l.b16 %v744
        %v1001 = vunpack.c.l.b16 %v745
        %v1002 = vunpack.c.l.b16 %v746
        %v1003 = vunpack.c.l.b16 %v747
        %v1004 = vunpack.c.l.b16 %v748
        %v1005 = vunpack.c.l.b16 %v749
        %v1006 = vunpack.c.l.b16 %v750
        %v1007 = vunpack.c.l.b16 %v751
        %v1008 = vunpack.c.l.b16 %v752
        %v1009 = vunpack.c.l.b16 %v753
        %v1010 = vunpack.c.l.b16 %v754
        %v1011 = vunpack.c.l.b16 %v755
        %v1012 = vunpack.c.l.b16 %v756
        %v1013 = vunpack.c.l.b16 %v757
        %v1014 = vunpack.c.l.b16 %v758
        %v1015 = vunpack.c.l.b16 %v759
        %v1016 = vunpack.c.l.b16 %v760
        %v1017 = vunpack.c.l.b16 %v761
        %v1018 = vunpack.c.l.b16 %v762
        %v1019 = vunpack.c.l.b16 %v763
        %v1020 = vunpack.c.l.b16 %v764
        %v1021 = vunpack.c.l.b16 %v765
        %v1022 = vunpack.c.l.b16 %v766
        %v1023 = vunpack.c.l.b16 %v767
        %v1024 = vunpack.c.l.b16 %v768
        %v1025 = vunpack.c.l.b16 %v769
        %v1026 = vunpack.c.l.b16 %v770
        %v1027 = vunpack.c.l.b16 %v771
        %v1028 = vunpack.c.l.b16 %v772
        %v1029 = vunpack.c.l.b16 %v773
        %v1030 = vpack.c.b16 %v903, %v902
        %v1031 = vpack.c.b16 %v905, %v904
        %v1032 = vpack.c.b16 %v907, %v906
        %v1033 = vpack.c.b16 %v909, %v908
        %v1034 = vpack.c.b16 %v911, %v910
        %v1035 = vpack.c.b16 %v913, %v912
        %v1036 = vpack.c.b16 %v915, %v914
        %v1037 = vpack.c.b16 %v917, %v916
        %v1038 = vpack.c.b16 %v919, %v918
        %v1039 = vpack.c.b16 %v921, %v920
        %v1040 = vpack.c.b16 %v923, %v922
        %v1041 = vpack.c.b16 %v925, %v924
        %v1042 = vpack.c.b16 %v927, %v926
        %v1043 = vpack.c.b16 %v929, %v928
        %v1044 = vpack.c.b16 %v931, %v930
        %v1045 = vpack.c.b16 %v933, %v932
        %v1046 = vpack.c.b16 %v935, %v934
        %v1047 = vpack.c.b16 %v937, %v936
        %v1048 = vpack.c.b16 %v939, %v938
        %v1049 = vpack.c.b16 %v941, %v940
        %v1050 = vpack.c.b16 %v943, %v942
        %v1051 = vpack.c.b16 %v945, %v944
        %v1052 = vpack.c.b16 %v947, %v946
        %v1053 = vpack.c.b16 %v949, %v948
        %v1054 = vpack.c.b16 %v951, %v950
        %v1055 = vpack.c.b16 %v953, %v952
        %v1056 = vpack.c.b16 %v955, %v954
        %v1057 = vpack.c.b16 %v957, %v956
        %v1058 = vpack.c.b16 %v959, %v958
        %v1059 = vpack.c.b16 %v961, %v960
        %v1060 = vpack.c.b16 %v963, %v962
        %v1061 = vpack.c.b16 %v965, %v964
        %v1062 = vpack.c.b16 %v967, %v966
        %v1063 = vpack.c.b16 %v969, %v968
        %v1064 = vpack.c.b16 %v971, %v970
        %v1065 = vpack.c.b16 %v973, %v972
        %v1066 = vpack.c.b16 %v975, %v974
        %v1067 = vpack.c.b16 %v977, %v976
        %v1068 = vpack.c.b16 %v979, %v978
        %v1069 = vpack.c.b16 %v981, %v980
        %v1070 = vpack.c.b16 %v983, %v982
        %v1071 = vpack.c.b16 %v985, %v984
        %v1072 = vpack.c.b16 %v987, %v986
        %v1073 = vpack.c.b16 %v989, %v988
        %v1074 = vpack.c.b16 %v991, %v990
        %v1075 = vpack.c.b16 %v993, %v992
        %v1076 = vpack.c.b16 %v995, %v994
        %v1077 = vpack.c.b16 %v997, %v996
        %v1078 = vpack.c.b16 %v999, %v998
        %v1079 = vpack.c.b16 %v1001, %v1000
        %v1080 = vpack.c.b16 %v1003, %v1002
        %v1081 = vpack.c.b16 %v1005, %v1004
        %v1082 = vpack.c.b16 %v1007, %v1006
        %v1083 = vpack.c.b16 %v1009, %v1008
        %v1084 = vpack.c.b16 %v1011, %v1010
        %v1085 = vpack.c.b16 %v1013, %v1012
        %v1086 = vpack.c.b16 %v1015, %v1014
        %v1087 = vpack.c.b16 %v1017, %v1016
        %v1088 = vpack.c.b16 %v1019, %v1018
        %v1089 = vpack.c.b16 %v1021, %v1020
        %v1090 = vpack.c.b16 %v1023, %v1022
        %v1091 = vpack.c.b16 %v1025, %v1024
        %v1092 = vpack.c.b16 %v1027, %v1026
        %v1093 = vpack.c.b16 %v1029, %v1028
        %1158 = vmatprep.subr.bf16.mxu0 0
        %1159 = vmatpush1.bf16.msra.mxu0 %v1030
        %1160 = vmatprep.subr.bf16.mxu0 0
        %1161 = vmatpush1.bf16.msra.mxu0 %v1031
        %1162 = vmatprep.subr.bf16.mxu0 0
        %1163 = vmatpush1.bf16.msra.mxu0 %v1032
        %1164 = vmatprep.subr.bf16.mxu0 0
        %1165 = vmatpush1.bf16.msra.mxu0 %v1033
        %1166 = vmatprep.subr.bf16.mxu0 0
        %1167 = vmatpush1.bf16.msra.mxu0 %v1034
        %1168 = vmatprep.subr.bf16.mxu0 0
        %1169 = vmatpush1.bf16.msra.mxu0 %v1035
        %1170 = vmatprep.subr.bf16.mxu0 0
        %1171 = vmatpush1.bf16.msra.mxu0 %v1036
        %1172 = vmatprep.subr.bf16.mxu0 0
        %1173 = vmatpush1.bf16.msra.mxu0 %v1037
        %1174 = vmatprep.subr.bf16.mxu0 0
        %1175 = vmatpush1.bf16.msra.mxu0 %v1038
        %1176 = vmatprep.subr.bf16.mxu0 0
        %1177 = vmatpush1.bf16.msra.mxu0 %v1039
        %1178 = vmatprep.subr.bf16.mxu0 0
        %1179 = vmatpush1.bf16.msra.mxu0 %v1040
        %1180 = vmatprep.subr.bf16.mxu0 0
        %1181 = vmatpush1.bf16.msra.mxu0 %v1041
        %1182 = vmatprep.subr.bf16.mxu0 0
        %1183 = vmatpush1.bf16.msra.mxu0 %v1042
        %1184 = vmatprep.subr.bf16.mxu0 0
        %1185 = vmatpush1.bf16.msra.mxu0 %v1043
        %1186 = vmatprep.subr.bf16.mxu0 0
        %1187 = vmatpush1.bf16.msra.mxu0 %v1044
        %1188 = vmatprep.subr.bf16.mxu0 0
        %1189 = vmatpush1.bf16.msra.mxu0 %v1045
        %1190 = vmatprep.mubr.bf16.mxu0 %v639
        %1191 = vmatmul.mubr.bf16.gmra.mrb[0].mxu0 %v638
        %v1192 = vpop.f32.mrb[0].mxu0
        %v1193 = vadd.f32 0.0, %v1192
        %v1194 = vpop.f32.mrb[0].mxu0
        %v1195 = vpop.f32.mrb[0].mxu0
        %v1196 = vpop.f32.mrb[0].mxu0
        %1197 = vdwg.mxu0
        %1198 = vmatprep.subr.bf16.mxu0 0
        %1199 = vmatpush1.bf16.msra.mxu0 %v1046
        %1200 = vmatprep.subr.bf16.mxu0 0
        %1201 = vmatpush1.bf16.msra.mxu0 %v1047
        %1202 = vmatprep.subr.bf16.mxu0 0
        %1203 = vmatpush1.bf16.msra.mxu0 %v1048
        %1204 = vmatprep.subr.bf16.mxu0 0
        %1205 = vmatpush1.bf16.msra.mxu0 %v1049
        %1206 = vmatprep.subr.bf16.mxu0 0
        %1207 = vmatpush1.bf16.msra.mxu0 %v1050
        %1208 = vmatprep.subr.bf16.mxu0 0
        %1209 = vmatpush1.bf16.msra.mxu0 %v1051
        %1210 = vmatprep.subr.bf16.mxu0 0
        %1211 = vmatpush1.bf16.msra.mxu0 %v1052
        %1212 = vmatprep.subr.bf16.mxu0 0
        %1213 = vmatpush1.bf16.msra.mxu0 %v1053
        %1214 = vmatprep.subr.bf16.mxu0 0
        %1215 = vmatpush1.bf16.msra.mxu0 %v1054
        %1216 = vmatprep.subr.bf16.mxu0 0
        %1217 = vmatpush1.bf16.msra.mxu0 %v1055
        %1218 = vmatprep.subr.bf16.mxu0 0
        %1219 = vmatpush1.bf16.msra.mxu0 %v1056
        %1220 = vmatprep.subr.bf16.mxu0 0
        %1221 = vmatpush1.bf16.msra.mxu0 %v1057
        %1222 = vmatprep.subr.bf16.mxu0 0
        %1223 = vmatpush1.bf16.msra.mxu0 %v1058
        %1224 = vmatprep.subr.bf16.mxu0 0
        %1225 = vmatpush1.bf16.msra.mxu0 %v1059
        %1226 = vmatprep.subr.bf16.mxu0 0
        %1227 = vmatpush1.bf16.msra.mxu0 %v1060
        %1228 = vmatprep.subr.bf16.mxu0 0
        %1229 = vmatpush1.bf16.msra.mxu0 %v1061
        %1230 = vmatprep.mubr.bf16.mxu0 %v641
        %1231 = vmatmul.mubr.bf16.gmra.mrb[0].mxu0 %v640
        %v1232 = vpop.f32.mrb[0].mxu0
        %v1233 = vadd.f32 %v1193, %v1232
        %v1234 = vpop.f32.mrb[0].mxu0
        %v1235 = vpop.f32.mrb[0].mxu0
        %v1236 = vpop.f32.mrb[0].mxu0
        %1237 = vdwg.mxu0
        %1238 = vmatprep.subr.bf16.mxu0 0
        %1239 = vmatpush1.bf16.msra.mxu0 %v1062
        %1240 = vmatprep.subr.bf16.mxu0 0
        %1241 = vmatpush1.bf16.msra.mxu0 %v1063
        %1242 = vmatprep.subr.bf16.mxu0 0
        %1243 = vmatpush1.bf16.msra.mxu0 %v1064
        %1244 = vmatprep.subr.bf16.mxu0 0
        %1245 = vmatpush1.bf16.msra.mxu0 %v1065
        %1246 = vmatprep.subr.bf16.mxu0 0
        %1247 = vmatpush1.bf16.msra.mxu0 %v1066
        %1248 = vmatprep.subr.bf16.mxu0 0
        %1249 = vmatpush1.bf16.msra.mxu0 %v1067
        %1250 = vmatprep.subr.bf16.mxu0 0
        %1251 = vmatpush1.bf16.msra.mxu0 %v1068
        %1252 = vmatprep.subr.bf16.mxu0 0
        %1253 = vmatpush1.bf16.msra.mxu0 %v1069
        %1254 = vmatprep.subr.bf16.mxu0 0
        %1255 = vmatpush1.bf16.msra.mxu0 %v1070
        %1256 = vmatprep.subr.bf16.mxu0 0
        %1257 = vmatpush1.bf16.msra.mxu0 %v1071
        %1258 = vmatprep.subr.bf16.mxu0 0
        %1259 = vmatpush1.bf16.msra.mxu0 %v1072
        %1260 = vmatprep.subr.bf16.mxu0 0
        %1261 = vmatpush1.bf16.msra.mxu0 %v1073
        %1262 = vmatprep.subr.bf16.mxu0 0
        %1263 = vmatpush1.bf16.msra.mxu0 %v1074
        %1264 = vmatprep.subr.bf16.mxu0 0
        %1265 = vmatpush1.bf16.msra.mxu0 %v1075
        %1266 = vmatprep.subr.bf16.mxu0 0
        %1267 = vmatpush1.bf16.msra.mxu0 %v1076
        %1268 = vmatprep.subr.bf16.mxu0 0
        %1269 = vmatpush1.bf16.msra.mxu0 %v1077
        %1270 = vmatprep.mubr.bf16.mxu0 %v643
        %1271 = vmatmul.mubr.bf16.gmra.mrb[0].mxu0 %v642
        %v1272 = vpop.f32.mrb[0].mxu0
        %v1273 = vadd.f32 %v1233, %v1272
        %v1274 = vpop.f32.mrb[0].mxu0
        %v1275 = vpop.f32.mrb[0].mxu0
        %v1276 = vpop.f32.mrb[0].mxu0
        %1277 = vdwg.mxu0
        %1278 = vmatprep.subr.bf16.mxu0 0
        %1279 = vmatpush1.bf16.msra.mxu0 %v1078
        %1280 = vmatprep.subr.bf16.mxu0 0
        %1281 = vmatpush1.bf16.msra.mxu0 %v1079
        %1282 = vmatprep.subr.bf16.mxu0 0
        %1283 = vmatpush1.bf16.msra.mxu0 %v1080
        %1284 = vmatprep.subr.bf16.mxu0 0
        %1285 = vmatpush1.bf16.msra.mxu0 %v1081
        %1286 = vmatprep.subr.bf16.mxu0 0
        %1287 = vmatpush1.bf16.msra.mxu0 %v1082
        %1288 = vmatprep.subr.bf16.mxu0 0
        %1289 = vmatpush1.bf16.msra.mxu0 %v1083
        %1290 = vmatprep.subr.bf16.mxu0 0
        %1291 = vmatpush1.bf16.msra.mxu0 %v1084
        %1292 = vmatprep.subr.bf16.mxu0 0
        %1293 = vmatpush1.bf16.msra.mxu0 %v1085
        %1294 = vmatprep.subr.bf16.mxu0 0
        %1295 = vmatpush1.bf16.msra.mxu0 %v1086
        %1296 = vmatprep.subr.bf16.mxu0 0
        %1297 = vmatpush1.bf16.msra.mxu0 %v1087
        %1298 = vmatprep.subr.bf16.mxu0 0
        %1299 = vmatpush1.bf16.msra.mxu0 %v1088
        %1300 = vmatprep.subr.bf16.mxu0 0
        %1301 = vmatpush1.bf16.msra.mxu0 %v1089
        %1302 = vmatprep.subr.bf16.mxu0 0
        %1303 = vmatpush1.bf16.msra.mxu0 %v1090
        %1304 = vmatprep.subr.bf16.mxu0 0
        %1305 = vmatpush1.bf16.msra.mxu0 %v1091
        %1306 = vmatprep.subr.bf16.mxu0 0
        %1307 = vmatpush1.bf16.msra.mxu0 %v1092
        %1308 = vmatprep.subr.bf16.mxu0 0
        %1309 = vmatpush1.bf16.msra.mxu0 %v1093
        %1310 = vmatprep.mubr.bf16.mxu0 %v645
        %1311 = vmatmul.mubr.bf16.gmra.mrb[0].mxu0 %v644
        %v1312 = vpop.f32.mrb[0].mxu0
        %v1313 = vadd.f32 %v1273, %v1312
        %v1314 = vpop.f32.mrb[0].mxu0
        %v1315 = vpop.f32.mrb[0].mxu0
        %v1316 = vpop.f32.mrb[0].mxu0
        %1317 = vdwg.mxu0
        %v1318 = vmul.f32 %v1313, 0.00390625
        %v1319 = vld [vmem:[%s4] sm:$0xff]
        %v1320 = vld [vmem:[%s5] sm:$0x1]
        %v1322 = vlaneseq
        %v1323 = vshrl.u32 %v1322, 7
        %v1324 = vsub.s32 0, %v1323
        %v1325 = vrot.slane %v1320, %v1324
        %1327 = vxpose.xlu0.b32.start [1/16] %v1318, 128
        %1328 = vxpose.xlu0.b32.cont [2/16] 0.0, 128
        %1329 = vxpose.xlu0.b32.cont [3/16] 0.0, 128
        %1330 = vxpose.xlu0.b32.cont [4/16] 0.0, 128
        %1331 = vxpose.xlu0.b32.cont [5/16] 0.0, 128
        %1332 = vxpose.xlu0.b32.cont [6/16] 0.0, 128
        %1333 = vxpose.xlu0.b32.cont [7/16] 0.0, 128
        %1334 = vxpose.xlu0.b32.cont [8/16] 0.0, 128
        %1335 = vxpose.xlu0.b32.cont [9/16] 0.0, 128
        %1336 = vxpose.xlu0.b32.cont [10/16] 0.0, 128
        %1337 = vxpose.xlu0.b32.cont [11/16] 0.0, 128
        %1338 = vxpose.xlu0.b32.cont [12/16] 0.0, 128
        %1339 = vxpose.xlu0.b32.cont [13/16] 0.0, 128
        %1340 = vxpose.xlu0.b32.cont [14/16] 0.0, 128
        %1341 = vxpose.xlu0.b32.cont [15/16] 0.0, 128
        %1342 = vxpose.xlu0.b32.end [16/16] 0.0, 128
        %v1343 = vpop.trf.xlu0
        %v1344 = vpop.trf.xlu0
        %v1345 = vpop.trf.xlu0
        %v1346 = vpop.trf.xlu0
        %v1347 = vpop.trf.xlu0
        %v1348 = vpop.trf.xlu0
        %v1349 = vpop.trf.xlu0
        %v1350 = vpop.trf.xlu0
        %v1351 = vpop.trf.xlu0
        %v1352 = vpop.trf.xlu0
        %v1353 = vpop.trf.xlu0
        %v1354 = vpop.trf.xlu0
        %v1355 = vpop.trf.xlu0
        %v1356 = vpop.trf.xlu0
        %v1357 = vpop.trf.xlu0
        %v1358 = vpop.trf.xlu0
        %vm1359 = vcmask 64512
        %v1361 = vsel %vm1359, %v1343, 0
        %1363 = vmatprep.subr.mxu0 0.0
        %1364 = vmatpush1.msra.mxu0 %v1319
        %1365 = vmatprep.subr.mxu0 0.0
        %1366 = vmatpush1.msra.mxu0 0.0
        %1367 = vmatprep.subr.mxu0 0.0
        %1368 = vmatpush1.msra.mxu0 0.0
        %1369 = vmatprep.subr.mxu0 0.0
        %1370 = vmatpush1.msra.mxu0 0.0
        %1371 = vmatprep.subr.mxu0 0.0
        %1372 = vmatpush1.msra.mxu0 0.0
        %1373 = vmatprep.subr.mxu0 0.0
        %1374 = vmatpush1.msra.mxu0 0.0
        %1375 = vmatprep.subr.mxu0 0.0
        %1376 = vmatpush1.msra.mxu0 0.0
        %1377 = vmatprep.subr.mxu0 0.0
        %1378 = vmatpush1.msra.mxu0 0.0
        %1379 = vmatprep.subr.mxu0 0.0
        %1380 = vmatpush1.msra.mxu0 0.0
        %1381 = vmatprep.subr.mxu0 0.0
        %1382 = vmatpush1.msra.mxu0 0.0
        %1383 = vmatprep.subr.mxu0 0.0
        %1384 = vmatpush1.msra.mxu0 0.0
        %1385 = vmatprep.subr.mxu0 0.0
        %1386 = vmatpush1.msra.mxu0 0.0
        %1387 = vmatprep.subr.mxu0 0.0
        %1388 = vmatpush1.msra.mxu0 0.0
        %1389 = vmatprep.subr.mxu0 0.0
        %1390 = vmatpush1.msra.mxu0 0.0
        %1391 = vmatprep.subr.mxu0 0.0
        %1392 = vmatpush1.msra.mxu0 0.0
        %1393 = vmatprep.subr.mxu0 0.0
        %1394 = vmatpush1.msra.mxu0 0.0
        %1395 = vmatprep.subr.mxu0 0.0
        %1396 = vmatpush1.msra.mxu0 0.0
        %1397 = vmatprep.subr.mxu0 0.0
        %1398 = vmatpush1.msra.mxu0 0.0
        %1399 = vmatprep.subr.mxu0 0.0
        %1400 = vmatpush1.msra.mxu0 0.0
        %1401 = vmatprep.subr.mxu0 0.0
        %1402 = vmatpush1.msra.mxu0 0.0
        %1403 = vmatprep.subr.mxu0 0.0
        %1404 = vmatpush1.msra.mxu0 0.0
        %1405 = vmatprep.subr.mxu0 0.0
        %1406 = vmatpush1.msra.mxu0 0.0
        %1407 = vmatprep.subr.mxu0 0.0
        %1408 = vmatpush1.msra.mxu0 0.0
        %1409 = vmatprep.subr.mxu0 0.0
        %1410 = vmatpush1.msra.mxu0 0.0
        %1411 = vmatprep.subr.mxu0 0.0
        %1412 = vmatpush1.msra.mxu0 0.0
        %1413 = vmatprep.subr.mxu0 0.0
        %1414 = vmatpush1.msra.mxu0 0.0
        %1415 = vmatprep.subr.mxu0 0.0
        %1416 = vmatpush1.msra.mxu0 0.0
        %1417 = vmatprep.subr.mxu0 0.0
        %1418 = vmatpush1.msra.mxu0 0.0
        %1419 = vmatprep.subr.mxu0 0.0
        %1420 = vmatpush1.msra.mxu0 0.0
        %1421 = vmatprep.subr.mxu0 0.0
        %1422 = vmatpush1.msra.mxu0 0.0
        %1423 = vmatprep.subr.mxu0 0.0
        %1424 = vmatpush1.msra.mxu0 0.0
        %1425 = vmatprep.subr.mxu0 0.0
        %1426 = vmatpush1.msra.mxu0 0.0
        %1427 = vmatprep.mubr.f32.mxu0 0.0
        %1428 = vmatmul.mubr.f32.gmra.mrb[0].mxu0 %v1361
        %v1429 = vpop.f32.mrb[0].mxu0
        %v1430 = vadd.f32 %v1325, %v1429
        %v1431 = vpop.f32.mrb[0].mxu0
        %1432 = vdwg.mxu0
        %vm1433 = vcmask 257024
        %1434 = vst.msk [vmem:[%s308] sm:$0xf] %vm1433, %v1430
        %p1435 = scmp.lt.s32.totalorder %s17, 1
        %s1436 = scalar_select %p1435, %s17, 1
        %s1437 = smul.addr %s1436, 4
        %s1438 = scalar_lea.vmem %s6, %s1437
        // Predicated region
        $region68: #{siamese_forward.1} parent=62 // pred_check
          %p1439 = pneg %p166
        $region69: #{siamese_forward.1} parent=62 // pred_check_branch
          %1441 = sbr.rel (%p1439) target = $region71
        $region70: #{siamese_forward.1} parent=62 // pred_region
          _
        $region71: #{siamese_forward.1} parent=62 // pred_fallthru
          _
      $region63: #{siamese_forward.1} parent=5 // pred_fallthru
        _
      %p1442 = scmp.le.s32.totalorder 2, %s12
      // Predicated region
      $region72: #{siamese_forward.1} parent=5 // pred_check
        %p1443 = pneg %p1442
      $region73: #{siamese_forward.1} parent=5 // pred_check_branch
        %1445 = sbr.rel (%p1443) target = $region75
      $region74: #{siamese_forward.1} parent=5 // pred_region
        %s1446 = ssub.s32 %s12, 2
        // Predicated region
        $region76: #{siamese_forward.1} parent=74 // pred_check
          %p1447 = pneg %p172
        $region77: #{siamese_forward.1} parent=74 // pred_check_branch
          %1449 = sbr.rel (%p1447) target = $region79
        $region78: #{siamese_forward.1} parent=74 // pred_region
          %p1450 = scmp.lt.s32.totalorder %s18, 1
          %s1451 = scalar_select %p1450, %s18, 1
          %s1452 = smul.addr %s1451, 4
          %s1453 = scalar_lea.vmem %s6, %s1452
        $region79: #{siamese_forward.1} parent=74 // pred_fallthru
          _
      $region75: #{siamese_forward.1} parent=5 // pred_fallthru
        _
    $region6: #{siamese_forward.1} parent=1 // loop_footer
      %s16 = sadd.s32 1, %s12
    $region7: #{siamese_forward.1} parent=1 // loop_footer_branch
      %11 = sbr.rel target = $region3
    $region8: #{siamese_forward.1} parent=1 // loop_exit
      _

</llo_original>
